<compile_context>
chip_gen: v6e
topology: v6e:2x2x1
jax: 0.10.0
libtpu: 0.0.40
codegen_flags: <defaults>
</compile_context>

<pallas_src>
import functools

import jax
import jax.numpy as jnp
from jax import lax
from jax.experimental import pallas as pl
from jax.experimental.pallas import tpu as pltpu


def _layernorm_kernel(x_ref, gamma_ref, beta_ref, o_ref, *, eps, inv_c):
    # x_ref block: (C, tT) (batch dim squeezed); gamma/beta blocks: (C, 1).
    x = x_ref[...].astype(jnp.float32)                      # (C, tT)

    # Fused single-pass statistics over the channel (sublane) axis.
    s1 = jnp.sum(x, axis=0, keepdims=True)                  # (1, tT)
    s2 = jnp.sum(x * x, axis=0, keepdims=True)              # (1, tT)
    mean = s1 * inv_c                                       # (1, tT)
    var = jnp.maximum(s2 * inv_c - mean * mean, 0.0)        # (1, tT)
    rstd = lax.rsqrt(var + eps)                             # (1, tT)

    gamma = gamma_ref[...].astype(jnp.float32)              # (C, 1)
    beta = beta_ref[...].astype(jnp.float32)                # (C, 1)

    # y = (x - mean) * rstd * gamma + beta, with gamma folded into rstd.
    y = (x - mean) * (rstd * gamma) + beta                  # (C, tT)
    o_ref[...] = y.astype(o_ref.dtype)


def _choose_time_tile(channels, time, itemsize):
    """Pick a lane-dense time tile that bounds per-buffer VMEM use (~2 MiB)."""
    if time % 128 != 0:
        # Ragged T: fall back to a single full-extent time block (satisfies the
        # (8,128) rule because the block equals the full array dim).
        return time
    # Per-buffer budget; in + out are each double-buffered -> ~4x this total.
    per_buffer_budget = 2 * 1024 * 1024
    max_tt = max(128, (per_buffer_budget // max(1, channels * itemsize)) // 128 * 128)
    for tt in (8192, 4096, 2048, 1024, 512, 256, 128):
        if tt <= max_tt and time % tt == 0:
            return tt
    return 128


def layer_norm(x, gamma, beta, eps=1e-4):
    """x: [B, C, ...]; gamma, beta: [C]. Normalizes over dim=1 (channels)."""
    orig_shape = x.shape
    B, C = x.shape[0], x.shape[1]
    if x.ndim == 2:
        x3 = x.reshape(B, C, 1)
    else:
        # Flatten all trailing spatial/time dims into one lane-dense axis.
        x3 = x.reshape(B, C, -1)
    _, _, T = x3.shape

    tt = _choose_time_tile(C, T, jnp.dtype(x3.dtype).itemsize)
    n_t = T // tt

    gamma2 = gamma.reshape(C, 1)
    beta2 = beta.reshape(C, 1)

    kernel = functools.partial(_layernorm_kernel, eps=float(eps), inv_c=1.0 / C)

    out = pl.pallas_call(
        kernel,
        out_shape=jax.ShapeDtypeStruct((B, C, T), x3.dtype),
        grid_spec=pltpu.PrefetchScalarGridSpec(
            num_scalar_prefetch=0,
            grid=(B, n_t),
            in_specs=[
                pl.BlockSpec((pl.Squeezed(), C, tt), lambda b, t: (b, 0, t)),
                pl.BlockSpec((C, 1), lambda b, t: (0, 0)),
                pl.BlockSpec((C, 1), lambda b, t: (0, 0)),
            ],
            out_specs=pl.BlockSpec((pl.Squeezed(), C, tt), lambda b, t: (b, 0, t)),
        ),
        compiler_params=pltpu.CompilerParams(
            # Both grid axes are independent -> megacore sharding on v7x.
            dimension_semantics=("parallel", "parallel"),
            # Explicit scoped-VMEM budget: above v5e's 16 MiB default, well
            # under v7x's 64 MiB physical VMEM; double-buffered in/out at the
            # chosen tile sizes stays far below this.
            vmem_limit_bytes=32 * 1024 * 1024,
        ),
    )(x3, gamma2, beta2)
    return out.reshape(orig_shape)


def layer_norm_ref(x, gamma, beta, eps=1e-4):
    n_dims = x.ndim
    mean = jnp.mean(x, axis=1, keepdims=True)
    var = jnp.mean((x - mean) ** 2, axis=1, keepdims=True)
    xn = (x - mean) * lax.rsqrt(var + eps)
    shape = (1, -1) + (1,) * (n_dims - 2)
    return xn * gamma.reshape(shape) + beta.reshape(shape)


def _check(shape, key):
    kx, kg, kb = jax.random.split(key, 3)
    C = shape[1]
    x = jax.random.normal(kx, shape, dtype=jnp.float32)
    # nn.Parameter(torch.ones/zeros) init, perturbed so the affine path is live.
    gamma = jnp.ones((C,), dtype=jnp.float32) + 0.1 * jax.random.normal(kg, (C,))
    beta = jnp.zeros((C,), dtype=jnp.float32) + 0.1 * jax.random.normal(kb, (C,))

    out = jax.block_until_ready(layer_norm(x, gamma, beta, eps=1e-4))
    ref = layer_norm_ref(x, gamma, beta, eps=1e-4)
    assert out.shape == shape
    assert jnp.allclose(out, ref, atol=2e-5, rtol=2e-5), f"mismatch vs reference at {shape}"


if __name__ == "__main__":
    key = jax.random.PRNGKey(0)
    k0, k1, k2 = jax.random.split(key, 3)

    # Small shape matching the module's typical test use (ragged T -> full-T block).
    _check((2, 4, 16), k0)
    # Lane-dense shape exercising the tiled-T path (tt=2048, grid=(2, 2)).
    _check((2, 256, 4096), k1)
    # Higher-rank input (module supports any n_dims); trailing dims flatten to T.
    _check((2, 4, 8, 8), k2)

    print("KERNEL_OK")
</pallas_src>

<mosaic_0001>
module attributes {stable_mosaic.version = 11 : i64} {
  func.func @_layernorm_kernel(%arg0: i32, %arg1: i32, %arg2: memref<1x4x16xf32, #tpu.memory_space<vmem>>, %arg3: memref<4x1xf32, #tpu.memory_space<vmem>>, %arg4: memref<4x1xf32, #tpu.memory_space<vmem>>, %arg5: memref<1x4x16xf32, #tpu.memory_space<vmem>>) attributes {dimension_semantics = [#tpu.dimension_semantics<parallel>, #tpu.dimension_semantics<parallel>], iteration_bounds = array<i64: 2, 1>, scalar_prefetch = 0 : i64, scratch_operands = 0 : i64, tpu.core_type = #tpu.core_type<tc>, window_params = [{transform_indices = @transform_0, window_bounds = array<i64: 1, 4, 16>}, {pipeline_mode = #tpu.pipeline_mode<synchronous>, transform_indices = @transform_1, window_bounds = array<i64: 4, 1>}, {pipeline_mode = #tpu.pipeline_mode<synchronous>, transform_indices = @transform_2, window_bounds = array<i64: 4, 1>}, {transform_indices = @transform_3, window_bounds = array<i64: 1, 4, 16>}]} {
    %c0 = arith.constant 0 : index
    %c0_0 = arith.constant 0 : index
    %c0_1 = arith.constant 0 : index
    %0 = vector.load %arg2[%c0, %c0_0, %c0_1] : memref<1x4x16xf32, #tpu.memory_space<vmem>>, vector<1x4x16xf32>
    %1 = vector.shape_cast %0 : vector<1x4x16xf32> to vector<4x16xf32>
    %cst = arith.constant dense<0.000000e+00> : vector<16xf32>
    %2 = vector.multi_reduction <add>, %1, %cst [0] : vector<4x16xf32> to vector<16xf32>
    %3 = vector.shape_cast %2 : vector<16xf32> to vector<1x16xf32>
    %4 = arith.mulf %1, %1 : vector<4x16xf32>
    %cst_2 = arith.constant dense<0.000000e+00> : vector<16xf32>
    %5 = vector.multi_reduction <add>, %4, %cst_2 [0] : vector<4x16xf32> to vector<16xf32>
    %6 = vector.shape_cast %5 : vector<16xf32> to vector<1x16xf32>
    %cst_3 = arith.constant 2.500000e-01 : f32
    %7 = vector.broadcast %cst_3 : f32 to vector<1x16xf32>
    %8 = arith.mulf %3, %7 : vector<1x16xf32>
    %cst_4 = arith.constant 2.500000e-01 : f32
    %9 = vector.broadcast %cst_4 : f32 to vector<1x16xf32>
    %10 = arith.mulf %6, %9 : vector<1x16xf32>
    %11 = arith.mulf %8, %8 : vector<1x16xf32>
    %12 = arith.subf %10, %11 : vector<1x16xf32>
    %cst_5 = arith.constant 0.000000e+00 : f32
    %13 = vector.broadcast %cst_5 : f32 to vector<1x16xf32>
    %14 = arith.maximumf %12, %13 : vector<1x16xf32>
    %cst_6 = arith.constant 9.99999974E-5 : f32
    %15 = vector.broadcast %cst_6 : f32 to vector<1x16xf32>
    %16 = arith.addf %14, %15 : vector<1x16xf32>
    %17 = math.rsqrt %16 : vector<1x16xf32>
    %c0_7 = arith.constant 0 : index
    %c0_8 = arith.constant 0 : index
    %18 = vector.load %arg3[%c0_7, %c0_8] : memref<4x1xf32, #tpu.memory_space<vmem>>, vector<4x1xf32>
    %c0_9 = arith.constant 0 : index
    %c0_10 = arith.constant 0 : index
    %19 = vector.load %arg4[%c0_9, %c0_10] : memref<4x1xf32, #tpu.memory_space<vmem>>, vector<4x1xf32>
    %20 = vector.broadcast %8 : vector<1x16xf32> to vector<4x16xf32>
    %21 = arith.subf %1, %20 : vector<4x16xf32>
    %22 = vector.broadcast %17 : vector<1x16xf32> to vector<4x16xf32>
    %23 = vector.broadcast %18 : vector<4x1xf32> to vector<4x16xf32>
    %24 = arith.mulf %22, %23 : vector<4x16xf32>
    %25 = arith.mulf %21, %24 : vector<4x16xf32>
    %26 = vector.broadcast %19 : vector<4x1xf32> to vector<4x16xf32>
    %27 = arith.addf %25, %26 : vector<4x16xf32>
    %c0_11 = arith.constant 0 : index
    %c0_12 = arith.constant 0 : index
    %c0_13 = arith.constant 0 : index
    %28 = vector.load %arg5[%c0_11, %c0_12, %c0_13] : memref<1x4x16xf32, #tpu.memory_space<vmem>>, vector<1x4x16xf32>
    %29 = vector.shape_cast %28 : vector<1x4x16xf32> to vector<4x16xf32>
    %30 = vector.shape_cast %27 : vector<4x16xf32> to vector<1x4x16xf32>
    tpu.vector_store %arg5[%c0_11, %c0_12, %c0_13], %30 {strides = array<i32>} : memref<1x4x16xf32, #tpu.memory_space<vmem>>, vector<1x4x16xf32>,
    return
  }
  func.func @transform_0(%arg0: i32, %arg1: i32) -> (i32, i32, i32) {
    %c0_i32 = arith.constant 0 : i32
    %c0_i32_0 = arith.constant 0 : i32
    return %arg0, %c0_i32, %arg1 : i32, i32, i32
  }
  func.func @transform_1(%arg0: i32, %arg1: i32) -> (i32, i32) {
    %c0_i32 = arith.constant 0 : i32
    %c0_i32_0 = arith.constant 0 : i32
    %c0_i32_1 = arith.constant 0 : i32
    return %c0_i32, %c0_i32_0 : i32, i32
  }
  func.func @transform_2(%arg0: i32, %arg1: i32) -> (i32, i32) {
    %c0_i32 = arith.constant 0 : i32
    %c0_i32_0 = arith.constant 0 : i32
    %c0_i32_1 = arith.constant 0 : i32
    return %c0_i32, %c0_i32_0 : i32, i32
  }
  func.func @transform_3(%arg0: i32, %arg1: i32) -> (i32, i32, i32) {
    %c0_i32 = arith.constant 0 : i32
    %c0_i32_0 = arith.constant 0 : i32
    return %arg0, %c0_i32, %arg1 : i32, i32, i32
  }
}

</mosaic_0001>

<llo_original>
// kernel: tpu_custom_call.1
$region0: #{tpu_custom_call.1}
  #allocation0 [shape = 'u32[]', space=smem, size = 0x4, offset = 0x4, fixed_abs, tag = 'smem constant byte address 0x4 - core index']
  #allocation1 [shape = 'u32[144,128]{1,0:T(1,128)}', space=vmem, size = 0x12000, scoped, tag = 'internal scratch']
  %s0 = inlined_call_operand.vmem [shape: f32[2,4,16], index: 0, kind: input, shape index: {}]
  %s1 = inlined_call_operand.vmem [shape: f32[4,1], index: 1, kind: input, shape index: {}]
  %s2 = inlined_call_operand.vmem [shape: f32[4,1], index: 2, kind: input, shape index: {}]
  %s3 = inlined_call_operand.hbm [shape: f32[2,4,16], index: 3, kind: output, shape index: {}]
  %s4 = sld [smem:[#allocation0]]
  $region45: #{tpu_custom_call.1} parent=0
    _
  %s6 = ssub.s32 1, %s4
  %s7 = scalar_select 0, %s6, %s4
  $region1: #{tpu_custom_call.1} parent=0
    #allocation2 [shape = 'u8[4096]{0}', space=vmem, size = 0x1000, scoped, tag = 'output window, operand 0']
    #allocation3 [shape = 's32[2]{0}', space=sflag, size = 0x8, scoped, tag = 'scoped memory for tpu_custom_call.1']
    %8 = vsyncpa [#allocation3], 0
    %s9 = scalar_lea.sflag [#allocation3], 1
    %10 = vsyncpa %s9, 0
    loop: start=0, step=1, limit=4
    $region2: #{tpu_custom_call.1} parent=1 // loop_pre_header
      _
    $region3: #{tpu_custom_call.1} parent=1 // loop_header
      %s12 = sphi 0, %s16
      %p13 = scmp.ge.s32.totalorder %s12, 4
      %s19 = sphi 0, %s31
      %s20 = sphi 0, %s27
      %s21 = sphi 0, %s19
      %s22 = sphi 0, %s20
      %s23 = sphi 0, %s21
      %s24 = sphi 0, %s22
      %s36 = sphi 0, %s38
      %s39 = sphi 0, %s36
      %s40 = sphi 0, %s39
      %s56 = sphi 0, %s40
      %s60 = sphi 0, %s60
      %s62 = sphi 0, %s60
      %s63 = sphi 0, %s62
      %s77 = sphi 0, %s63
      %s81 = sphi 0, %s81
      %s83 = sphi 0, %s81
      %s84 = sphi 0, %s83
      %s98 = sphi 0, %s84
      %s106 = sphi 0, %s108
      %s109 = sphi 0, %s106
      %s110 = sphi 0, %s109
      %s126 = sphi 0, %s110
    $region4: #{tpu_custom_call.1} parent=1 // loop_header_branch
      %15 = sbr.rel (%p13) target = $region8
    $region5: #{tpu_custom_call.1} parent=1 // loop_body
      %s17 = ssub.s32 %s12, 1
      %s18 = ssub.s32 %s12, 2
      %s25 = sadd.s32 1, %s20
      %p26 = scmp.ge.s32.totalorder %s25, 1
      %s27 = scalar_select %p26, 0, %s25
      %s28 = sadd.s32 1, %s19
      %s29 = scalar_select %p26, %s28, %s19
      %p30 = scmp.ge.s32.totalorder %s29, 2
      %s31 = scalar_select %p30, 0, %s29
      %s32 = ssub.s32 %s19, %s31
      %s33 = ssub.s32 %s20, %s27
      %s34 = sor.u32 %s32, %s33
      %p35 = scmp.eq.s32.totalorder %s34, 0
      %s37 = sadd.s32 %s36, 1
      %s38 = scalar_select %p35, %s36, %s37
      %p41 = pneg %p35
      %p42 = scmp.eq.s32.totalorder %s12, 1
      %p43 = por %p41, %p42
      %p44 = scmp.ne.s32.totalorder %s36, %s39
      %p45 = scmp.eq.s32.totalorder %s12, 0
      %p46 = por %p44, %p45
      %p47 = scmp.ne.s32.totalorder %s36, %s39
      %p48 = scmp.eq.s32.totalorder %s17, 1
      %p49 = por %p47, %p48
      %p50 = scmp.ne.s32.totalorder %s39, %s40
      %p51 = scmp.eq.s32.totalorder %s17, 0
      %p52 = por %p50, %p51
      %p53 = scmp.ne.s32.totalorder %s39, %s40
      %p54 = scmp.eq.s32.totalorder %s18, 1
      %p55 = por %p53, %p54
      %p57 = scmp.ne.s32.totalorder %s40, %s56
      %p58 = scmp.eq.s32.totalorder %s18, 0
      %p59 = por %p57, %p58
      %s61 = sadd.s32 %s60, 1
      %p64 = scmp.eq.s32.totalorder %s12, 1
      %p65 = scmp.ne.s32.totalorder %s60, %s62
      %p66 = scmp.eq.s32.totalorder %s12, 0
      %p67 = por %p65, %p66
      %p68 = scmp.ne.s32.totalorder %s60, %s62
      %p69 = scmp.eq.s32.totalorder %s17, 1
      %p70 = por %p68, %p69
      %p71 = scmp.ne.s32.totalorder %s62, %s63
      %p72 = scmp.eq.s32.totalorder %s17, 0
      %p73 = por %p71, %p72
      %p74 = scmp.ne.s32.totalorder %s62, %s63
      %p75 = scmp.eq.s32.totalorder %s18, 1
      %p76 = por %p74, %p75
      %p78 = scmp.ne.s32.totalorder %s63, %s77
      %p79 = scmp.eq.s32.totalorder %s18, 0
      %p80 = por %p78, %p79
      %s82 = sadd.s32 %s81, 1
      %p85 = scmp.eq.s32.totalorder %s12, 1
      %p86 = scmp.ne.s32.totalorder %s81, %s83
      %p87 = scmp.eq.s32.totalorder %s12, 0
      %p88 = por %p86, %p87
      %p89 = scmp.ne.s32.totalorder %s81, %s83
      %p90 = scmp.eq.s32.totalorder %s17, 1
      %p91 = por %p89, %p90
      %p92 = scmp.ne.s32.totalorder %s83, %s84
      %p93 = scmp.eq.s32.totalorder %s17, 0
      %p94 = por %p92, %p93
      %p95 = scmp.ne.s32.totalorder %s83, %s84
      %p96 = scmp.eq.s32.totalorder %s18, 1
      %p97 = por %p95, %p96
      %p99 = scmp.ne.s32.totalorder %s84, %s98
      %p100 = scmp.eq.s32.totalorder %s18, 0
      %p101 = por %p99, %p100
      %s102 = ssub.s32 %s19, %s31
      %s103 = ssub.s32 %s20, %s27
      %s104 = sor.u32 %s102, %s103
      %p105 = scmp.eq.s32.totalorder %s104, 0
      %s107 = sadd.s32 %s106, 1
      %s108 = scalar_select %p105, %s106, %s107
      %p111 = pneg %p105
      %p112 = scmp.eq.s32.totalorder %s12, 1
      %p113 = por %p111, %p112
      %p114 = scmp.ne.s32.totalorder %s106, %s109
      %p115 = scmp.eq.s32.totalorder %s12, 0
      %p116 = por %p114, %p115
      %p117 = scmp.ne.s32.totalorder %s106, %s109
      %p118 = scmp.eq.s32.totalorder %s17, 1
      %p119 = por %p117, %p118
      %p120 = scmp.ne.s32.totalorder %s109, %s110
      %p121 = scmp.eq.s32.totalorder %s17, 0
      %p122 = por %p120, %p121
      %p123 = scmp.ne.s32.totalorder %s109, %s110
      %p124 = scmp.eq.s32.totalorder %s18, 1
      %p125 = por %p123, %p124
      %p127 = scmp.ne.s32.totalorder %s110, %s126
      %p128 = scmp.eq.s32.totalorder %s18, 0
      %p129 = por %p127, %p128
      %p130 = scmp.le.s32.totalorder 1, %s12
      %p131 = scmp.lt.s32.totalorder %s12, 3
      %p132 = pnand %p130, %p131
      %p133 = pneg %p132
      // Predicated region
      $region9: #{tpu_custom_call.1} parent=5 // pred_check
        _
      $region10: #{tpu_custom_call.1} parent=5 // pred_check_branch
        %135 = sbr.rel (%p132) target = $region12
      $region11: #{tpu_custom_call.1} parent=5 // pred_region
        %s136 = ssub.s32 %s12, 1
        // Predicated region
        $region13: #{tpu_custom_call.1} parent=11 // pred_check
          %p137 = pneg %p73
        $region14: #{tpu_custom_call.1} parent=11 // pred_check_branch
          %139 = sbr.rel (%p137) target = $region16
        $region15: #{tpu_custom_call.1} parent=11 // pred_region
          _
        $region16: #{tpu_custom_call.1} parent=11 // pred_fallthru
          _
        // Predicated region
        $region17: #{tpu_custom_call.1} parent=11 // pred_check
          %p140 = pneg %p94
        $region18: #{tpu_custom_call.1} parent=11 // pred_check_branch
          %142 = sbr.rel (%p140) target = $region20
        $region19: #{tpu_custom_call.1} parent=11 // pred_region
          _
        $region20: #{tpu_custom_call.1} parent=11 // pred_fallthru
          _
      $region12: #{tpu_custom_call.1} parent=5 // pred_fallthru
        _
      %p143 = scmp.lt.s32.totalorder %s12, 2
      // Predicated region
      $region21: #{tpu_custom_call.1} parent=5 // pred_check
        %p144 = pneg %p143
      $region22: #{tpu_custom_call.1} parent=5 // pred_check_branch
        %146 = sbr.rel (%p144) target = $region24
      $region23: #{tpu_custom_call.1} parent=5 // pred_region
        // Predicated region
        $region25: #{tpu_custom_call.1} parent=23 // pred_check
          %p147 = pneg %p46
        $region26: #{tpu_custom_call.1} parent=23 // pred_check_branch
          %149 = sbr.rel (%p147) target = $region28
        $region27: #{tpu_custom_call.1} parent=23 // pred_region
          %p150 = scmp.lt.s32.totalorder %s19, 1
          %s151 = scalar_select %p150, %s19, 1
          %p152 = scmp.lt.s32.totalorder %s20, 0
          %s153 = scalar_select %p152, %s20, 0
          %s154 = sadd.s32 %s153, %s151
          %s155 = smul.addr %s154, 4
          %s156 = scalar_lea.vmem %s0, %s155
        $region28: #{tpu_custom_call.1} parent=23 // pred_fallthru
          _
      $region24: #{tpu_custom_call.1} parent=5 // pred_fallthru
        _
      %p157 = scmp.le.s32.totalorder 1, %s12
      %p158 = scmp.lt.s32.totalorder %s12, 3
      %p159 = pnand %p157, %p158
      %p160 = pneg %p159
      // Predicated region
      $region29: #{tpu_custom_call.1} parent=5 // pred_check
        _
      $region30: #{tpu_custom_call.1} parent=5 // pred_check_branch
        %162 = sbr.rel (%p159) target = $region32
      $region31: #{tpu_custom_call.1} parent=5 // pred_region
        %s163 = ssub.s32 %s12, 1
        %p164 = scmp.lt.s32.totalorder %s21, 1
        %s165 = scalar_select %p164, %s21, 1
        %p166 = scmp.lt.s32.totalorder %s22, 0
        %s167 = scalar_select %p166, %s22, 0
        %s168 = sadd.s32 %s167, %s165
        %s169 = smul.addr %s168, 4
        %s170 = scalar_lea.vmem %s0, %s169
        %p171 = pneg %p52
        %p172 = pneg %p49
        %p173 = pneg %p73
        %p174 = pneg %p70
        %p175 = pneg %p94
        %p176 = pneg %p91
        %p177 = pneg %p122
        %p178 = pneg %p119
        %s179 = sand.u32 %s109, 1
        %s180 = scalar_lea.sflag [#allocation3], %s179
        %s181 = sand.u32 %s109, 1
        %s182 = smul.addr %s181, 4
        %s183 = scalar_lea.vmem [#allocation2], %s182
        %p184 = scmp.lt.s32.totalorder %s21, 1
        %s185 = scalar_select %p184, %s21, 1
        %p186 = scmp.lt.s32.totalorder %s22, 0
        %s187 = scalar_select %p186, %s22, 0
        %s188 = sadd.s32 %s187, %s185
        %s189 = smul.addr %s188, 4
        %s190 = scalar_lea.vmem %s0, %s189
        %v191 = vld [vmem:[%s190] sm:$0xf]
        %vm192 = vcmask 125952
        %v193 = vsel %vm192, %v191, 0.0
        %v194 = vrot.slane %v193, 4
        %v195 = vadd.f32 %v193, %v194
        %v196 = vrot.slane %v195, 2
        %v197 = vadd.f32 %v195, %v196
        %v198 = vrot.slane %v197, 1
        %v199 = vadd.f32 %v197, %v198
        %v200 = vmul.f32 %v191, %v191
        %v201 = vsel %vm192, %v200, 0.0
        %v202 = vrot.slane %v201, 4
        %v203 = vadd.f32 %v201, %v202
        %v204 = vrot.slane %v203, 2
        %v205 = vadd.f32 %v203, %v204
        %v206 = vrot.slane %v205, 1
        %v207 = vadd.f32 %v205, %v206
        %v208 = vmul.f32 %v199, 0.25
        %v209 = vmul.f32 %v207, 0.25
        %v210 = vmul.f32 %v208, %v208
        %v211 = vsub.f32 %v209, %v210
        %v212 = vmax.f32 %v211, 0.0
        %v213 = vadd.f32 %v212, 0.0001
        %v214 = vrsqrt.pop %v213
        %v215 = vld [vmem:[%s1] sm:$0xf]
        %v216 = vld [vmem:[%s2] sm:$0xf]
        %v217 = vsub.f32 %v191, %v208
        %219 = vset.pattern.permute.xlu0 0
        %220 = vperm.xlu0 %219, %v215
        %v221 = vpop.permute.xlu0 %220
        %v223 = vmul.f32 %v214, %v221
        %v224 = vmul.f32 %v217, %v223
        %226 = vset.pattern.permute.xlu0 0
        %227 = vperm.xlu0 %226, %v216
        %v228 = vpop.permute.xlu0 %227
        %v230 = vadd.f32 %v224, %v228
        %231 = vst.msk [vmem:[%s183] sm:$0xf] %vm192, %v230
        %s232 = sand.u32 %s109, 1
        %s233 = scalar_lea.sflag [#allocation3], %s232
        %s234 = sand.u32 %s109, 1
        %s235 = smul.addr %s234, 4
        %s236 = scalar_lea.vmem [#allocation2], %s235
        // Predicated region
        $region33: #{tpu_custom_call.1} parent=31 // pred_check
          %p237 = pneg %p119
        $region34: #{tpu_custom_call.1} parent=31 // pred_check_branch
          %239 = sbr.rel (%p237) target = $region36
        $region35: #{tpu_custom_call.1} parent=31 // pred_region
          %s241 = ssub.s32 64, 64
          %242 = vsyncadd %s233, %s241
          %s243 = sadd.s32 %s22, %s21
          %s244 = smul.addr %s243, 64
          %s245 = scalar_lea.hbm %s3, %s244
          %s247 = sshll.u32 %s236, 4
          %s248 = int_to_ptr.vmem [resolvable:$true] %s247
          %250 = dma.vmem_to_hbm [thread:$0]  %s248, 64, %s245, %s233
        $region36: #{tpu_custom_call.1} parent=31 // pred_fallthru
          _
      $region32: #{tpu_custom_call.1} parent=5 // pred_fallthru
        _
      %p251 = scmp.le.s32.totalorder 2, %s12
      // Predicated region
      $region37: #{tpu_custom_call.1} parent=5 // pred_check
        %p252 = pneg %p251
      $region38: #{tpu_custom_call.1} parent=5 // pred_check_branch
        %254 = sbr.rel (%p252) target = $region40
      $region39: #{tpu_custom_call.1} parent=5 // pred_region
        %s255 = ssub.s32 %s12, 2
        // Predicated region
        $region41: #{tpu_custom_call.1} parent=39 // pred_check
          %p256 = pneg %p125
        $region42: #{tpu_custom_call.1} parent=39 // pred_check_branch
          %258 = sbr.rel (%p256) target = $region44
        $region43: #{tpu_custom_call.1} parent=39 // pred_region
          %s259 = sand.u32 %s110, 1
          %s260 = scalar_lea.sflag [#allocation3], %s259
          %s261 = sand.u32 %s110, 1
          %s262 = smul.addr %s261, 4
          %s263 = scalar_lea.vmem [#allocation2], %s262
          %264 = dma.done %s260, 64
        $region44: #{tpu_custom_call.1} parent=39 // pred_fallthru
          _
      $region40: #{tpu_custom_call.1} parent=5 // pred_fallthru
        _
    $region6: #{tpu_custom_call.1} parent=1 // loop_footer
      %s16 = sadd.s32 1, %s12
    $region7: #{tpu_custom_call.1} parent=1 // loop_footer_branch
      %11 = sbr.rel target = $region3
    $region8: #{tpu_custom_call.1} parent=1 // loop_exit
      _
    %265 = vsyncpa [#allocation3], 1
    %s266 = scalar_lea.sflag [#allocation3], 1
    %267 = vsyncpa %s266, 1

</llo_original>
